<compile_context>
chip_gen: v7x
topology: tpu7x:2x2x1
jax: 0.10.0
libtpu: 0.0.40
codegen_flags: <defaults>
</compile_context>

<pallas_src>
import jax
import jax.numpy as jnp
from jax import lax
from jax.experimental import pallas as pl
from jax.experimental.pallas import tpu as pltpu

EOS_ID = 0      # EOS token index in the synthetic vocab
PAD_ID = 0      # padding id (masked out, weight 0)
LANE = 128      # TPU lane width
BATCH_TILE = 8  # sublane-dense batch tile (rows per grid step)


def _avg_embed_kernel(ids_ref, w_ref, tbl_ref, out_ref):
    """ids_ref: (TB, T) int32   -- token ids for this batch tile.
    w_ref:   (TB, T) f32        -- per-token weight = mask / count (0 for pad).
    tbl_ref: (V, Dp) f32        -- full embedding table, VMEM-resident.
    out_ref: (TB, Dp) f32       -- masked mean per batch row.
    """
    ids = ids_ref[...]                                   # (TB, T) int32
    w = w_ref[...]                                       # (TB, T) f32
    tb, t = ids.shape
    v = tbl_ref.shape[0]

    # Scatter the per-token weights into an (TB, V) weight-vs-vocab matrix:
    #   W[b, v] = sum_t w[b, t] * [ids[b, t] == v]
    vocab_iota = lax.broadcasted_iota(jnp.int32, (tb, t, v), 2)   # (TB, T, V)
    onehot_w = jnp.where(ids[:, :, None] == vocab_iota,
                         w[:, :, None], 0.0)                      # (TB, T, V)
    weight_mat = jnp.sum(onehot_w, axis=1)                        # (TB, V)

    # One MXU matmul per tile: (TB, V) x (V, Dp) -> (TB, Dp).
    out_ref[...] = jnp.dot(weight_mat, tbl_ref[...],
                           preferred_element_type=jnp.float32)


def prepare_embedding_table(embedding_table):
    """Pad the embed dim to a lane multiple ONCE at init time."""
    V, D = embedding_table.shape
    Dp = ((D + LANE - 1) // LANE) * LANE
    if Dp == D:
        return embedding_table.astype(jnp.float32)
    return jnp.pad(embedding_table.astype(jnp.float32), ((0, 0), (0, Dp - D)))


def average_utterance_embed(token_ids, mask, emb_padded, embed_dim):
    """token_ids: (B, T) int32, mask: (B, T) float {0,1},
    emb_padded: (V, Dp) f32 (lane-padded once at init)  ->  (B, embed_dim) f32
    masked mean of the embedded tokens (matches SequenceBatch.reduce_mean)."""
    B, T = token_ids.shape
    V, Dp = emb_padded.shape

    TB = BATCH_TILE
    Bp = ((B + TB - 1) // TB) * TB

    # Fold 1/count into the per-token weights host-side (count >= 1 defense).
    count = jnp.maximum(jnp.sum(mask, axis=1, keepdims=True), 1.0)
    weights = (mask / count).astype(jnp.float32)          # (B, T)

    ids = token_ids.astype(jnp.int32)
    if Bp != B:
        ids = jnp.pad(ids, ((0, Bp - B), (0, 0)))
        weights = jnp.pad(weights, ((0, Bp - B), (0, 0)))  # padded rows -> 0

    grid_spec = pltpu.PrefetchScalarGridSpec(
        num_scalar_prefetch=0,
        grid=(Bp // TB,),                     # one step per 8-row batch tile
        in_specs=[
            pl.BlockSpec((TB, T), lambda i: (i, 0)),   # token ids tile
            pl.BlockSpec((TB, T), lambda i: (i, 0)),   # per-token weights tile
            pl.BlockSpec((V, Dp), lambda i: (0, 0)),   # resident table (1 DMA)
        ],
        out_specs=pl.BlockSpec((TB, Dp), lambda i: (i, 0)),
    )

    out_p = pl.pallas_call(
        _avg_embed_kernel,
        out_shape=jax.ShapeDtypeStruct((Bp, Dp), jnp.float32),
        grid_spec=grid_spec,
        compiler_params=pltpu.CompilerParams(
            dimension_semantics=("parallel",),   # batch tiles shard across TCs
        ),
    )(ids, weights, emb_padded)

    return out_p[:B, :embed_dim]


def _reference(token_ids, mask, embedding_table):
    emb = embedding_table[token_ids]                     # (B, T, D)
    summed = jnp.sum(emb * mask[:, :, None], axis=1)     # (B, D)
    count = jnp.sum(mask, axis=1, keepdims=True)         # (B, 1)
    return summed / count


if __name__ == "__main__":
    # Small shapes consistent with the module:
    #   max_words = 7 -> sequence length T = max_words + 1 (EOS) = 8
    #   embed_dim D = 32, vocab V = 64, batch B = 2
    B, max_words, D, V = 2, 7, 32, 64
    T = max_words + 1

    key = jax.random.PRNGKey(0)
    k_emb, k_ids = jax.random.split(key)

    # Deterministic synthetic token-embedder table (vocab x embed_dim).
    embedding_table = jax.random.normal(k_emb, (V, D), dtype=jnp.float32)

    # Deterministic utterances: lengths (before EOS) of 4 and 7 tokens.
    raw_ids = jax.random.randint(k_ids, (B, T), 1, V, dtype=jnp.int32)
    lengths = jnp.array([4, 7], dtype=jnp.int32)         # tokens kept per row
    pos = jnp.arange(T, dtype=jnp.int32)[None, :]        # (1, T)

    # Truncate to max_words, place EOS right after, pad the rest.
    is_token = pos < lengths[:, None]
    is_eos = pos == lengths[:, None]
    token_ids = jnp.where(is_token, raw_ids,
                          jnp.where(is_eos, EOS_ID, PAD_ID)).astype(jnp.int32)
    mask = (is_token | is_eos).astype(jnp.float32)       # valid = token or EOS

    # Lane-pad the table once at init time (hoisted out of the hot path).
    emb_padded = prepare_embedding_table(embedding_table)

    out = average_utterance_embed(token_ids, mask, emb_padded, D)
    out = jax.block_until_ready(out)

    ref = _reference(token_ids, mask, embedding_table)
    assert out.shape == (B, D)
    assert jnp.allclose(out, ref, atol=1e-5, rtol=1e-5), "mismatch vs reference"

    print("KERNEL_OK")
</pallas_src>

<mosaic_0001>
module attributes {stable_mosaic.version = 11 : i64} {
  func.func @_avg_embed_kernel(%arg0: i32, %arg1: memref<8x8xi32, #tpu.memory_space<vmem>>, %arg2: memref<8x8xf32, #tpu.memory_space<vmem>>, %arg3: memref<64x128xf32, #tpu.memory_space<vmem>>, %arg4: memref<8x128xf32, #tpu.memory_space<vmem>>) attributes {dimension_semantics = [#tpu.dimension_semantics<parallel>], iteration_bounds = array<i64: 1>, scalar_prefetch = 0 : i64, scratch_operands = 0 : i64, tpu.core_type = #tpu.core_type<tc>, window_params = [{transform_indices = @transform_0, window_bounds = array<i64: 8, 8>}, {transform_indices = @transform_1, window_bounds = array<i64: 8, 8>}, {pipeline_mode = #tpu.pipeline_mode<synchronous>, transform_indices = @transform_2, window_bounds = array<i64: 64, 128>}, {transform_indices = @transform_3, window_bounds = array<i64: 8, 128>}]} {
    %c0 = arith.constant 0 : index
    %c0_0 = arith.constant 0 : index
    %0 = vector.load %arg1[%c0, %c0_0] : memref<8x8xi32, #tpu.memory_space<vmem>>, vector<8x8xi32>
    %c0_1 = arith.constant 0 : index
    %c0_2 = arith.constant 0 : index
    %1 = vector.load %arg2[%c0_1, %c0_2] : memref<8x8xf32, #tpu.memory_space<vmem>>, vector<8x8xf32>
    %2 = tpu.iota {dimensions = array<i32: 2>} : vector<8x8x64xi32>
    %3 = vector.shape_cast %0 : vector<8x8xi32> to vector<8x8x1xi32>
    %4 = vector.broadcast %3 : vector<8x8x1xi32> to vector<8x8x64xi32>
    %5 = arith.cmpi eq, %4, %2 : vector<8x8x64xi32>
    %6 = vector.shape_cast %1 : vector<8x8xf32> to vector<8x8x1xf32>
    %cst = arith.constant 0.000000e+00 : f32
    %7 = vector.shape_cast %6 : vector<8x8x1xf32> to vector<8x8x1xf32>
    %8 = vector.broadcast %7 : vector<8x8x1xf32> to vector<8x8x64xf32>
    %9 = vector.broadcast %cst : f32 to vector<8x8x64xf32>
    %10 = arith.select %5, %8, %9 : vector<8x8x64xi1>, vector<8x8x64xf32>
    %cst_3 = arith.constant dense<0.000000e+00> : vector<8x64xf32>
    %11 = vector.multi_reduction <add>, %10, %cst_3 [1] : vector<8x8x64xf32> to vector<8x64xf32>
    %c0_4 = arith.constant 0 : index
    %c0_5 = arith.constant 0 : index
    %12 = vector.load %arg3[%c0_4, %c0_5] : memref<64x128xf32, #tpu.memory_space<vmem>>, vector<64x128xf32>
    %cst_6 = arith.constant dense<0.000000e+00> : vector<8x128xf32>
    %13 = tpu.matmul %11, %12, %cst_6 {dimension_numbers = #tpu.dot_dimension_numbers<[1], [0], [0], [1], [0, 0, 1, 1], [], []>} : vector<8x64xf32>, vector<64x128xf32>, vector<8x128xf32> -> vector<8x128xf32>
    %c0_7 = arith.constant 0 : index
    %c0_8 = arith.constant 0 : index
    %14 = vector.load %arg4[%c0_7, %c0_8] : memref<8x128xf32, #tpu.memory_space<vmem>>, vector<8x128xf32>
    tpu.vector_store %arg4[%c0_7, %c0_8], %13 {strides = array<i32>} : memref<8x128xf32, #tpu.memory_space<vmem>>, vector<8x128xf32>,
    return
  }
  func.func @transform_0(%arg0: i32) -> (i32, i32) {
    %c0_i32 = arith.constant 0 : i32
    %c0_i32_0 = arith.constant 0 : i32
    return %arg0, %c0_i32 : i32, i32
  }
  func.func @transform_1(%arg0: i32) -> (i32, i32) {
    %c0_i32 = arith.constant 0 : i32
    %c0_i32_0 = arith.constant 0 : i32
    return %arg0, %c0_i32 : i32, i32
  }
  func.func @transform_2(%arg0: i32) -> (i32, i32) {
    %c0_i32 = arith.constant 0 : i32
    %c0_i32_0 = arith.constant 0 : i32
    %c0_i32_1 = arith.constant 0 : i32
    return %c0_i32, %c0_i32_0 : i32, i32
  }
  func.func @transform_3(%arg0: i32) -> (i32, i32) {
    %c0_i32 = arith.constant 0 : i32
    %c0_i32_0 = arith.constant 0 : i32
    return %arg0, %c0_i32 : i32, i32
  }
}

</mosaic_0001>

<llo_original>
// kernel: tpu_custom_call.1
$region0: #{tpu_custom_call.1}
  #allocation0 [shape = 'u32[]', space=smem, size = 0x4, offset = 0x4, fixed_abs, tag = 'smem constant byte address 0x4 - core index']
  #allocation1 [shape = 'u32[144,128]{1,0:T(1,128)}', space=vmem, size = 0x12000, scoped, tag = 'internal scratch']
  %s0 = inlined_call_operand.hbm [shape: s32[8,8], index: 0, kind: input, shape index: {}]
  %s1 = inlined_call_operand.hbm [shape: f32[8,8], index: 1, kind: input, shape index: {}]
  %s2 = inlined_call_operand.hbm [shape: f32[64,128], index: 2, kind: input, shape index: {}]
  %s3 = inlined_call_operand.hbm [shape: f32[8,128], index: 3, kind: output, shape index: {}]
  %s4 = sld [smem:[#allocation0]]
  $region34: #{tpu_custom_call.1} parent=0
    _
  %s6 = ssub.s32 1, %s4
  %s7 = scalar_select 0, %s6, %s4
  $region1: #{tpu_custom_call.1} parent=0
    #allocation2 [shape = 'u8[4096]{0}', space=vmem, size = 0x1000, scoped, tag = 'input window, operand 0, single buffered']
    #allocation3 [shape = 's32[1]{0}', space=sflag, size = 0x4, scoped, tag = 'scoped memory for tpu_custom_call.1']
    #allocation4 [shape = 's32[1]{0}', space=sflag, size = 0x4, scoped, tag = 'scoped memory for tpu_custom_call.1']
    #allocation5 [shape = 'u8[4096]{0}', space=vmem, size = 0x1000, scoped, tag = 'input window, operand 1, single buffered']
    #allocation6 [shape = 's32[1]{0}', space=sflag, size = 0x4, scoped, tag = 'scoped memory for tpu_custom_call.1']
    #allocation7 [shape = 'u8[32768]{0}', space=vmem, size = 0x8000, scoped, tag = 'input window, operand 2, single buffered']
    #allocation8 [shape = 'u8[4096]{0}', space=vmem, size = 0x1000, scoped, tag = 'output window, operand 0, single buffered']
    %8 = vsyncpa [#allocation3], 0
    %9 = vsyncpa [#allocation6], 0
    %10 = vsyncpa [#allocation4], 0
    // Predicated region
    $region2: #{tpu_custom_call.1} parent=1 // pred_check
      _
    $region3: #{tpu_custom_call.1} parent=1 // pred_check_branch
      %12 = sbr.rel (0) target = $region5
    $region4: #{tpu_custom_call.1} parent=1 // pred_region
      %s14 = ssub.s32 128, 128
      %15 = vsyncadd [#allocation3], %s14
      %s17 = sshll.u32 [#allocation2], 4
      %s18 = int_to_ptr.vmem [resolvable:$true] %s17
      %20 = dma.hbm_to_vmem [thread:$0]  %s0, 128, %s18, [#allocation3]
    $region5: #{tpu_custom_call.1} parent=1 // pred_fallthru
      _
    // Predicated region
    $region6: #{tpu_custom_call.1} parent=1 // pred_check
      _
    $region7: #{tpu_custom_call.1} parent=1 // pred_check_branch
      %22 = sbr.rel (0) target = $region9
    $region8: #{tpu_custom_call.1} parent=1 // pred_region
      %s24 = ssub.s32 128, 128
      %25 = vsyncadd [#allocation6], %s24
      %s27 = sshll.u32 [#allocation5], 4
      %s28 = int_to_ptr.vmem [resolvable:$true] %s27
      %30 = dma.hbm_to_vmem [thread:$0]  %s1, 128, %s28, [#allocation6]
    $region9: #{tpu_custom_call.1} parent=1 // pred_fallthru
      _
    // Predicated region
    $region10: #{tpu_custom_call.1} parent=1 // pred_check
      _
    $region11: #{tpu_custom_call.1} parent=1 // pred_check_branch
      %32 = sbr.rel (0) target = $region13
    $region12: #{tpu_custom_call.1} parent=1 // pred_region
      %s34 = ssub.s32 1024, 1024
      %35 = vsyncadd [#allocation6], %s34
      %s36 = sshll.u32 [#allocation7], 4
      %s37 = int_to_ptr.vmem [resolvable:$true] %s36
      %42 = dma.hbm_to_vmem [thread:$0]  %s2, 1024, %s37, [#allocation6], 128, 128, 8
    $region13: #{tpu_custom_call.1} parent=1 // pred_fallthru
      _
    // Predicated region
    $region14: #{tpu_custom_call.1} parent=1 // pred_check
      _
    $region15: #{tpu_custom_call.1} parent=1 // pred_check_branch
      %44 = sbr.rel (0) target = $region17
    $region16: #{tpu_custom_call.1} parent=1 // pred_region
      %45 = dma.done [#allocation3], 128
    $region17: #{tpu_custom_call.1} parent=1 // pred_fallthru
      _
    // Predicated region
    $region18: #{tpu_custom_call.1} parent=1 // pred_check
      _
    $region19: #{tpu_custom_call.1} parent=1 // pred_check_branch
      %47 = sbr.rel (0) target = $region21
    $region20: #{tpu_custom_call.1} parent=1 // pred_region
      %48 = dma.done [#allocation6], 128
    $region21: #{tpu_custom_call.1} parent=1 // pred_fallthru
      _
    // Predicated region
    $region22: #{tpu_custom_call.1} parent=1 // pred_check
      _
    $region23: #{tpu_custom_call.1} parent=1 // pred_check_branch
      %50 = sbr.rel (0) target = $region25
    $region24: #{tpu_custom_call.1} parent=1 // pred_region
      %51 = dma.done [#allocation6], 1024
    $region25: #{tpu_custom_call.1} parent=1 // pred_fallthru
      _
    %v52 = vld [vmem:[#allocation2] sm:$0xff]
    %v53 = vld [vmem:[#allocation5] sm:$0xff]
    %v54 = vlaneseq
    %v55 = vand.u32 %v54, 127
    %v56 = vlaneseq
    %v57 = vshrl.u32 %v56, 7
    %v58 = vsub.s32 0, %v57
    %v59 = vrot.slane %v52, %v58
    %61 = vbcast.lane.b32.xlu0 %v59, 256
    %v62 = vpop.permute.xlu0 %61
    %v63 = vlaneseq
    %v64 = vshrl.u32 %v63, 7
    %v65 = vsub.s32 1, %v64
    %v66 = vrot.slane %v52, %v65
    %68 = vbcast.lane.b32.xlu0 %v66, 256
    %v69 = vpop.permute.xlu0 %68
    %v70 = vlaneseq
    %v71 = vshrl.u32 %v70, 7
    %v72 = vsub.s32 2, %v71
    %v73 = vrot.slane %v52, %v72
    %75 = vbcast.lane.b32.xlu0 %v73, 256
    %v76 = vpop.permute.xlu0 %75
    %v77 = vlaneseq
    %v78 = vshrl.u32 %v77, 7
    %v79 = vsub.s32 3, %v78
    %v80 = vrot.slane %v52, %v79
    %82 = vbcast.lane.b32.xlu0 %v80, 256
    %v83 = vpop.permute.xlu0 %82
    %v84 = vlaneseq
    %v85 = vshrl.u32 %v84, 7
    %v86 = vsub.s32 4, %v85
    %v87 = vrot.slane %v52, %v86
    %89 = vbcast.lane.b32.xlu0 %v87, 256
    %v90 = vpop.permute.xlu0 %89
    %v91 = vlaneseq
    %v92 = vshrl.u32 %v91, 7
    %v93 = vsub.s32 5, %v92
    %v94 = vrot.slane %v52, %v93
    %96 = vbcast.lane.b32.xlu0 %v94, 256
    %v97 = vpop.permute.xlu0 %96
    %v98 = vlaneseq
    %v99 = vshrl.u32 %v98, 7
    %v100 = vsub.s32 6, %v99
    %v101 = vrot.slane %v52, %v100
    %103 = vbcast.lane.b32.xlu0 %v101, 256
    %v104 = vpop.permute.xlu0 %103
    %v105 = vlaneseq
    %v106 = vshrl.u32 %v105, 7
    %v107 = vsub.s32 7, %v106
    %v108 = vrot.slane %v52, %v107
    %110 = vbcast.lane.b32.xlu0 %v108, 256
    %v111 = vpop.permute.xlu0 %110
    %vm112 = vcmp.eq.s32.totalorder %v62, %v55
    %vm113 = vcmp.eq.s32.totalorder %v69, %v55
    %vm114 = vcmp.eq.s32.totalorder %v76, %v55
    %vm115 = vcmp.eq.s32.totalorder %v83, %v55
    %vm116 = vcmp.eq.s32.totalorder %v90, %v55
    %vm117 = vcmp.eq.s32.totalorder %v97, %v55
    %vm118 = vcmp.eq.s32.totalorder %v104, %v55
    %vm119 = vcmp.eq.s32.totalorder %v111, %v55
    %v120 = vlaneseq
    %v121 = vshrl.u32 %v120, 7
    %v122 = vsub.s32 0, %v121
    %v123 = vrot.slane %v53, %v122
    %125 = vbcast.lane.b32.xlu0 %v123, 256
    %v126 = vpop.permute.xlu0 %125
    %v127 = vlaneseq
    %v128 = vshrl.u32 %v127, 7
    %v129 = vsub.s32 1, %v128
    %v130 = vrot.slane %v53, %v129
    %132 = vbcast.lane.b32.xlu0 %v130, 256
    %v133 = vpop.permute.xlu0 %132
    %v134 = vlaneseq
    %v135 = vshrl.u32 %v134, 7
    %v136 = vsub.s32 2, %v135
    %v137 = vrot.slane %v53, %v136
    %139 = vbcast.lane.b32.xlu0 %v137, 256
    %v140 = vpop.permute.xlu0 %139
    %v141 = vlaneseq
    %v142 = vshrl.u32 %v141, 7
    %v143 = vsub.s32 3, %v142
    %v144 = vrot.slane %v53, %v143
    %146 = vbcast.lane.b32.xlu0 %v144, 256
    %v147 = vpop.permute.xlu0 %146
    %v148 = vlaneseq
    %v149 = vshrl.u32 %v148, 7
    %v150 = vsub.s32 4, %v149
    %v151 = vrot.slane %v53, %v150
    %153 = vbcast.lane.b32.xlu0 %v151, 256
    %v154 = vpop.permute.xlu0 %153
    %v155 = vlaneseq
    %v156 = vshrl.u32 %v155, 7
    %v157 = vsub.s32 5, %v156
    %v158 = vrot.slane %v53, %v157
    %160 = vbcast.lane.b32.xlu0 %v158, 256
    %v161 = vpop.permute.xlu0 %160
    %v162 = vlaneseq
    %v163 = vshrl.u32 %v162, 7
    %v164 = vsub.s32 6, %v163
    %v165 = vrot.slane %v53, %v164
    %167 = vbcast.lane.b32.xlu0 %v165, 256
    %v168 = vpop.permute.xlu0 %167
    %v169 = vlaneseq
    %v170 = vshrl.u32 %v169, 7
    %v171 = vsub.s32 7, %v170
    %v172 = vrot.slane %v53, %v171
    %174 = vbcast.lane.b32.xlu0 %v172, 256
    %v175 = vpop.permute.xlu0 %174
    %v176 = vsel %vm112, %v126, 0.0
    %v177 = vsel %vm113, %v133, 0.0
    %v178 = vsel %vm114, %v140, 0.0
    %v179 = vsel %vm115, %v147, 0.0
    %v180 = vsel %vm116, %v154, 0.0
    %v181 = vsel %vm117, %v161, 0.0
    %v182 = vsel %vm118, %v168, 0.0
    %v183 = vsel %vm119, %v175, 0.0
    %vm184 = vcmask 523264
    %v185 = vsel %vm184, %v176, 0.0
    %v186 = vrot.slane %v185, 4
    %v187 = vadd.f32 %v185, %v186
    %v188 = vrot.slane %v187, 2
    %v189 = vadd.f32 %v187, %v188
    %v190 = vrot.slane %v189, 1
    %v191 = vadd.f32 %v189, %v190
    %v192 = vsel %vm184, %v177, 0.0
    %v193 = vrot.slane %v192, 4
    %v194 = vadd.f32 %v192, %v193
    %v195 = vrot.slane %v194, 2
    %v196 = vadd.f32 %v194, %v195
    %v197 = vrot.slane %v196, 1
    %v198 = vadd.f32 %v196, %v197
    %v199 = vsel %vm184, %v178, 0.0
    %v200 = vrot.slane %v199, 4
    %v201 = vadd.f32 %v199, %v200
    %v202 = vrot.slane %v201, 2
    %v203 = vadd.f32 %v201, %v202
    %v204 = vrot.slane %v203, 1
    %v205 = vadd.f32 %v203, %v204
    %v206 = vsel %vm184, %v179, 0.0
    %v207 = vrot.slane %v206, 4
    %v208 = vadd.f32 %v206, %v207
    %v209 = vrot.slane %v208, 2
    %v210 = vadd.f32 %v208, %v209
    %v211 = vrot.slane %v210, 1
    %v212 = vadd.f32 %v210, %v211
    %v213 = vsel %vm184, %v180, 0.0
    %v214 = vrot.slane %v213, 4
    %v215 = vadd.f32 %v213, %v214
    %v216 = vrot.slane %v215, 2
    %v217 = vadd.f32 %v215, %v216
    %v218 = vrot.slane %v217, 1
    %v219 = vadd.f32 %v217, %v218
    %v220 = vsel %vm184, %v181, 0.0
    %v221 = vrot.slane %v220, 4
    %v222 = vadd.f32 %v220, %v221
    %v223 = vrot.slane %v222, 2
    %v224 = vadd.f32 %v222, %v223
    %v225 = vrot.slane %v224, 1
    %v226 = vadd.f32 %v224, %v225
    %v227 = vsel %vm184, %v182, 0.0
    %v228 = vrot.slane %v227, 4
    %v229 = vadd.f32 %v227, %v228
    %v230 = vrot.slane %v229, 2
    %v231 = vadd.f32 %v229, %v230
    %v232 = vrot.slane %v231, 1
    %v233 = vadd.f32 %v231, %v232
    %v234 = vsel %vm184, %v183, 0.0
    %v235 = vrot.slane %v234, 4
    %v236 = vadd.f32 %v234, %v235
    %v237 = vrot.slane %v236, 2
    %v238 = vadd.f32 %v236, %v237
    %v239 = vrot.slane %v238, 1
    %v240 = vadd.f32 %v238, %v239
    %v241 = vld [vmem:[#allocation7] sm:$0xff]
    %v242 = vld [vmem:[#allocation7 + $0x8] sm:$0xff]
    %v243 = vld [vmem:[#allocation7 + $0x10] sm:$0xff]
    %v244 = vld [vmem:[#allocation7 + $0x18] sm:$0xff]
    %v245 = vld [vmem:[#allocation7 + $0x20] sm:$0xff]
    %v246 = vld [vmem:[#allocation7 + $0x28] sm:$0xff]
    %v247 = vld [vmem:[#allocation7 + $0x30] sm:$0xff]
    %v248 = vld [vmem:[#allocation7 + $0x38] sm:$0xff]
    %vm257 = vcmask 1041409
    %v258 = vsel %vm257, %v198, %v191
    %vm259 = vcmask 1042434
    %v260 = vsel %vm259, %v205, %v258
    %vm261 = vcmask 1043459
    %v262 = vsel %vm261, %v212, %v260
    %vm263 = vcmask 1044484
    %v264 = vsel %vm263, %v219, %v262
    %vm265 = vcmask 1045509
    %v266 = vsel %vm265, %v226, %v264
    %vm267 = vcmask 1046534
    %v268 = vsel %vm267, %v233, %v266
    %vm269 = vcmask 1047559
    %v270 = vsel %vm269, %v240, %v268
    %v271 = vsel %vm184, %v270, 0
    %273 = vmatprep.subr.mxu0 0.0
    %274 = vmatpush1.msra.mxu0 %v241
    %275 = vmatprep.subr.mxu0 0.0
    %276 = vmatpush1.msra.mxu0 %v242
    %277 = vmatprep.subr.mxu0 0.0
    %278 = vmatpush1.msra.mxu0 %v243
    %279 = vmatprep.subr.mxu0 0.0
    %280 = vmatpush1.msra.mxu0 %v244
    %281 = vmatprep.subr.mxu0 0.0
    %282 = vmatpush1.msra.mxu0 %v245
    %283 = vmatprep.subr.mxu0 0.0
    %284 = vmatpush1.msra.mxu0 %v246
    %285 = vmatprep.subr.mxu0 0.0
    %286 = vmatpush1.msra.mxu0 %v247
    %287 = vmatprep.subr.mxu0 0.0
    %288 = vmatpush1.msra.mxu0 %v248
    %289 = vmatprep.subr.mxu0 0.0
    %290 = vmatpush1.msra.mxu0 0.0
    %291 = vmatprep.subr.mxu0 0.0
    %292 = vmatpush1.msra.mxu0 0.0
    %293 = vmatprep.subr.mxu0 0.0
    %294 = vmatpush1.msra.mxu0 0.0
    %295 = vmatprep.subr.mxu0 0.0
    %296 = vmatpush1.msra.mxu0 0.0
    %297 = vmatprep.subr.mxu0 0.0
    %298 = vmatpush1.msra.mxu0 0.0
    %299 = vmatprep.subr.mxu0 0.0
    %300 = vmatpush1.msra.mxu0 0.0
    %301 = vmatprep.subr.mxu0 0.0
    %302 = vmatpush1.msra.mxu0 0.0
    %303 = vmatprep.subr.mxu0 0.0
    %304 = vmatpush1.msra.mxu0 0.0
    %305 = vmatprep.subr.mxu0 0.0
    %306 = vmatpush1.msra.mxu0 0.0
    %307 = vmatprep.subr.mxu0 0.0
    %308 = vmatpush1.msra.mxu0 0.0
    %309 = vmatprep.subr.mxu0 0.0
    %310 = vmatpush1.msra.mxu0 0.0
    %311 = vmatprep.subr.mxu0 0.0
    %312 = vmatpush1.msra.mxu0 0.0
    %313 = vmatprep.subr.mxu0 0.0
    %314 = vmatpush1.msra.mxu0 0.0
    %315 = vmatprep.subr.mxu0 0.0
    %316 = vmatpush1.msra.mxu0 0.0
    %317 = vmatprep.subr.mxu0 0.0
    %318 = vmatpush1.msra.mxu0 0.0
    %319 = vmatprep.subr.mxu0 0.0
    %320 = vmatpush1.msra.mxu0 0.0
    %321 = vmatprep.subr.mxu0 0.0
    %322 = vmatpush1.msra.mxu0 0.0
    %323 = vmatprep.subr.mxu0 0.0
    %324 = vmatpush1.msra.mxu0 0.0
    %325 = vmatprep.subr.mxu0 0.0
    %326 = vmatpush1.msra.mxu0 0.0
    %327 = vmatprep.subr.mxu0 0.0
    %328 = vmatpush1.msra.mxu0 0.0
    %329 = vmatprep.subr.mxu0 0.0
    %330 = vmatpush1.msra.mxu0 0.0
    %331 = vmatprep.subr.mxu0 0.0
    %332 = vmatpush1.msra.mxu0 0.0
    %333 = vmatprep.subr.mxu0 0.0
    %334 = vmatpush1.msra.mxu0 0.0
    %335 = vmatprep.subr.mxu0 0.0
    %336 = vmatpush1.msra.mxu0 0.0
    %337 = vmatprep.mubr.f32.mxu0 0.0
    %338 = vmatmul.mubr.f32.gmra.mrb[0].mxu0 %v271
    %v339 = vpop.f32.mrb[0].mxu0
    %v340 = vadd.f32 0.0, %v339
    %v341 = vpop.f32.mrb[0].mxu0
    %342 = vdwg.mxu0
    %343 = vst [vmem:[#allocation8] sm:$0xff] %v340
    // Predicated region
    $region26: #{tpu_custom_call.1} parent=1 // pred_check
      _
    $region27: #{tpu_custom_call.1} parent=1 // pred_check_branch
      %345 = sbr.rel (0) target = $region29
    $region28: #{tpu_custom_call.1} parent=1 // pred_region
      %s347 = ssub.s32 128, 128
      %348 = vsyncadd [#allocation4], %s347
      %s350 = sshll.u32 [#allocation8], 4
      %s351 = int_to_ptr.vmem [resolvable:$true] %s350
      %353 = dma.vmem_to_hbm [thread:$0]  %s351, 128, %s3, [#allocation4]
    $region29: #{tpu_custom_call.1} parent=1 // pred_fallthru
      _
    // Predicated region
    $region30: #{tpu_custom_call.1} parent=1 // pred_check
      _
    $region31: #{tpu_custom_call.1} parent=1 // pred_check_branch
      %355 = sbr.rel (0) target = $region33
    $region32: #{tpu_custom_call.1} parent=1 // pred_region
      %356 = dma.done [#allocation4], 128
    $region33: #{tpu_custom_call.1} parent=1 // pred_fallthru
      _
    %357 = vsyncpa [#allocation3], 1
    %358 = vsyncpa [#allocation6], 1
    %359 = vsyncpa [#allocation4], 1

</llo_original>
